<compile_context>
chip_gen: v5e
topology: v5e:2x2
jax: 0.10.0
libtpu: 0.0.40
codegen_flags: <defaults>
</compile_context>

<pallas_src>
import functools
import math

import jax
import jax.numpy as jnp
from jax.experimental import pallas as pl
from jax.experimental.pallas import tpu as pltpu


def _se_kernel(x_ref, w1t_ref, b1_ref, w2t_ref, b2_ref, o_ref, *, inv_t):
    """One batch-block of the SE forward on a lane-dense (TB, C*Tp) tile."""
    x = x_ref[...]                                  # (TB, C*Tp), native dtype
    ct = x.shape[-1]
    c = w1t_ref.shape[0]
    t_pad = ct // c
    one = jnp.ones((), dtype=x.dtype)
    zero = jnp.zeros((), dtype=x.dtype)

    # AdaptiveAvgPool1d(1): per-channel sum over T as a lane-dense 0/1 matmul
    # (f32 accumulation on the MXU), then scale by 1/T (true T, so the zero
    # padding is exact).  pool[r, j] = 1 iff flattened column r belongs to
    # channel j (r // t_pad == j), written as a range test (no integer div).
    r_pc = jax.lax.broadcasted_iota(jnp.int32, (ct, c), 0)
    j_pc = jax.lax.broadcasted_iota(jnp.int32, (ct, c), 1) * t_pad
    pool = jnp.where((r_pc >= j_pc) & (r_pc < j_pc + t_pad), one, zero)
    s = jnp.dot(x, pool, preferred_element_type=jnp.float32) * inv_t  # (TB,C)

    # Conv1d(C -> K, kernel_size=1) + ReLU  ==  s @ W1^T + b1
    h = jnp.maximum(
        jnp.dot(s, w1t_ref[...], preferred_element_type=jnp.float32)
        + b1_ref[...], 0.0)                                           # (TB,K)

    # Conv1d(K -> C, kernel_size=1) + Sigmoid  ==  h @ W2^T + b2
    g = jax.nn.sigmoid(
        jnp.dot(h, w2t_ref[...], preferred_element_type=jnp.float32)
        + b2_ref[...])                                                # (TB,C)

    # Broadcast the per-channel gate over T while staying lane-dense:
    # expand[j, r] = 1 iff channel(r) == j, so (g @ expand)[b, r] = g[b, c(r)].
    # Exactly one nonzero (1.0) per output column -> exact in any dtype; done
    # in the input dtype so the multiply and the store stay in native width.
    j_ex = jax.lax.broadcasted_iota(jnp.int32, (c, ct), 0) * t_pad
    r_ex = jax.lax.broadcasted_iota(jnp.int32, (c, ct), 1)
    expand = jnp.where((r_ex >= j_ex) & (r_ex < j_ex + t_pad), one, zero)
    gate = jnp.dot(g.astype(x.dtype), expand)                     # (TB, C*Tp)

    o_ref[...] = x * gate


def _vmem_budget():
    """(streamed-block byte target, vmem_limit_bytes), sized from the chip.

    v5e/v6e have 128 MiB VMEM per TensorCore, v7x only 64 MiB.  in+out are
    double-buffered (~4x the streamed block), so target ~= capacity/16 leaves
    headroom for weights, in-kernel masks and compiler scratch.
    """
    try:
        cap = pltpu.get_tpu_info().vmem_capacity_bytes
    except Exception:  # query unavailable -> assume the smallest (v7x) VMEM
        cap = 64 * 1024 * 1024
    block_target = max(1 << 20, cap // 16)            # 8 MiB v5e/v6e, 4 MiB v7x
    vmem_limit = min(int(cap * 3 // 4), 96 * 1024 * 1024)  # 96 / 48 MiB
    return block_target, vmem_limit


def _batch_rows_per_block(batch, row_bytes, target_bytes):
    """Batch rows streamed per grid step (the block's second-to-last dim)."""
    if batch <= 8:
        return batch                      # full extent: always layout-legal
    tb = max(8, min(batch, target_bytes // max(row_bytes, 1)) // 8 * 8)
    # Megacore: v7x has 2 TensorCores; keep >= 2 grid steps on the "parallel"
    # batch axis so both cores get work (no-op cost on 1-TC v5e/v6e).
    half = -(-((batch + 1) // 2) // 8) * 8
    return min(tb, max(8, half))


def _padded_time(c, t):
    """Smallest Tp >= t with (c * Tp) % 128 == 0 (keeps stores lane-dense)."""
    step = 128 // math.gcd(c, 128)
    return ((t + step - 1) // step) * step


@jax.jit
def se_module(x, w1, b1, w2, b2):
    """SEModule forward. x: (B,C,T); w1: (K,C,1); b1: (K,); w2: (C,K,1); b2: (C,)."""
    B, C, T = x.shape
    K = w1.shape[0]

    block_target, vmem_limit = _vmem_budget()

    # 1x1 Conv1d weights are plain matrices; pre-transpose once (wrapper glue,
    # folded/cached by XLA under jit) so the kernel does row-major MXU matmuls.
    w1t = jnp.transpose(w1.reshape(K, C))           # (C, K)
    w2t = jnp.transpose(w2.reshape(C, K))           # (K, C)
    b1r = b1.reshape(1, K)
    b2r = b2.reshape(1, C)

    # Lane-dense streaming layout: (C, T) is contiguous in NCW so the reshape
    # to C*Tp is free; zero-pad T so C*Tp % 128 == 0 (full-width stores).
    Tp = _padded_time(C, T)
    xp = x if Tp == T else jnp.pad(x, ((0, 0), (0, 0), (0, Tp - T)))
    CTp = C * Tp
    x2 = xp.reshape(B, CTp)

    tb = _batch_rows_per_block(B, CTp * x.dtype.itemsize, block_target)
    grid = (pl.cdiv(B, tb),)
    # NOTE: a partial last batch block computes sigmoid/exp on padded/stale
    # rows; rows are independent and out-of-range rows are dropped on masked
    # writeback, so this is benign -- do not "fix" it.

    kernel = functools.partial(_se_kernel, inv_t=1.0 / T)

    out2 = pl.pallas_call(
        kernel,
        out_shape=jax.ShapeDtypeStruct((B, CTp), x.dtype),
        grid=grid,
        in_specs=[
            pl.BlockSpec((tb, CTp), lambda i: (i, 0)),   # x rows (streamed)
            pl.BlockSpec((C, K), lambda i: (0, 0)),      # W1^T (resident)
            pl.BlockSpec((1, K), lambda i: (0, 0)),      # b1
            pl.BlockSpec((K, C), lambda i: (0, 0)),      # W2^T (resident)
            pl.BlockSpec((1, C), lambda i: (0, 0)),      # b2
        ],
        out_specs=pl.BlockSpec((tb, CTp), lambda i: (i, 0)),
        compiler_params=pltpu.CompilerParams(
            dimension_semantics=("parallel",),           # megacore on v7x
            vmem_limit_bytes=vmem_limit,
        ),
    )(x2, w1t, b1r, w2t, b2r)

    out = out2.reshape(B, C, Tp)
    return out if Tp == T else out[:, :, :T]


def se_reference(x, w1, b1, w2, b2):
    """Pure-JAX (exact f32) reference of the PyTorch forward."""
    K, C = w1.shape[0], w1.shape[1]
    s = jnp.mean(x, axis=-1)                                           # (B, C)
    h = jnp.maximum(
        jnp.dot(s, w1.reshape(K, C).T,
                precision=jax.lax.Precision.HIGHEST) + b1, 0.0)        # (B, K)
    g = jax.nn.sigmoid(
        jnp.dot(h, w2.reshape(C, K).T,
                precision=jax.lax.Precision.HIGHEST) + b2)             # (B, C)
    return x * g[:, :, None]


def _check(B, C, T, K, key):
    kx, kw1, kb1, kw2, kb2 = jax.random.split(key, 5)
    x = jax.random.normal(kx, (B, C, T), dtype=jnp.float32)
    # Deterministic synthetic parameters (Conv1d shapes: (out, in, 1) + bias).
    w1 = 0.1 * jax.random.normal(kw1, (K, C, 1), dtype=jnp.float32)
    b1 = 0.1 * jax.random.normal(kb1, (K,), dtype=jnp.float32)
    w2 = 0.1 * jax.random.normal(kw2, (C, K, 1), dtype=jnp.float32)
    b2 = 0.1 * jax.random.normal(kb2, (C,), dtype=jnp.float32)

    out = jax.block_until_ready(se_module(x, w1, b1, w2, b2))
    ref = se_reference(x, w1, b1, w2, b2)
    assert out.shape == (B, C, T)
    # f32 inputs keep f32 in-kernel masks/weights, so the tolerance only needs
    # to cover MXU contraction-pass precision vs. the exact-f32 reference.
    assert jnp.allclose(out, ref, rtol=1e-2, atol=1e-3), (
        f"mismatch (B={B},C={C},T={T},K={K}): "
        f"max abs err = {jnp.max(jnp.abs(out - ref)):.3e}")


if __name__ == "__main__":
    # Small shapes consistent with the module: batch=2, channels=16, seq=32,
    # bottleneck=128 (the module's default).
    key = jax.random.PRNGKey(0)
    k0, k1 = jax.random.split(key)
    _check(B=2, C=16, T=32, K=128, key=k0)   # C*T already a multiple of 128
    _check(B=2, C=16, T=30, K=128, key=k1)   # exercises the exact T zero-pad
    print("KERNEL_OK")
</pallas_src>

<mosaic_0001>
module attributes {stable_mosaic.version = 11 : i64} {
  func.func @_se_kernel(%arg0: i32, %arg1: memref<2x512xf32, #tpu.memory_space<vmem>>, %arg2: memref<16x128xf32, #tpu.memory_space<vmem>>, %arg3: memref<1x128xf32, #tpu.memory_space<vmem>>, %arg4: memref<128x16xf32, #tpu.memory_space<vmem>>, %arg5: memref<1x16xf32, #tpu.memory_space<vmem>>, %arg6: memref<2x512xf32, #tpu.memory_space<vmem>>) attributes {dimension_semantics = [#tpu.dimension_semantics<parallel>], iteration_bounds = array<i64: 1>, scalar_prefetch = 0 : i64, scratch_operands = 0 : i64, tpu.core_type = #tpu.core_type<tc>, window_params = [{transform_indices = @transform_0, window_bounds = array<i64: 2, 512>}, {pipeline_mode = #tpu.pipeline_mode<synchronous>, transform_indices = @transform_1, window_bounds = array<i64: 16, 128>}, {pipeline_mode = #tpu.pipeline_mode<synchronous>, transform_indices = @transform_2, window_bounds = array<i64: 1, 128>}, {pipeline_mode = #tpu.pipeline_mode<synchronous>, transform_indices = @transform_3, window_bounds = array<i64: 128, 16>}, {pipeline_mode = #tpu.pipeline_mode<synchronous>, transform_indices = @transform_4, window_bounds = array<i64: 1, 16>}, {transform_indices = @transform_5, window_bounds = array<i64: 2, 512>}]} {
    %c0 = arith.constant 0 : index
    %c0_0 = arith.constant 0 : index
    %0 = vector.load %arg1[%c0, %c0_0] : memref<2x512xf32, #tpu.memory_space<vmem>>, vector<2x512xf32>
    %1 = tpu.iota {dimensions = array<i32: 0>} : vector<512x16xi32>
    %2 = tpu.iota {dimensions = array<i32: 1>} : vector<512x16xi32>
    %c32_i32 = arith.constant 32 : i32
    %3 = vector.broadcast %c32_i32 : i32 to vector<512x16xi32>
    %4 = arith.muli %2, %3 : vector<512x16xi32>
    %5 = arith.cmpi sge, %1, %4 : vector<512x16xi32>
    %c32_i32_1 = arith.constant 32 : i32
    %6 = vector.broadcast %c32_i32_1 : i32 to vector<512x16xi32>
    %7 = arith.addi %4, %6 : vector<512x16xi32>
    %8 = arith.cmpi slt, %1, %7 : vector<512x16xi32>
    %9 = arith.andi %5, %8 : vector<512x16xi1>
    %cst = arith.constant 1.000000e+00 : f32
    %cst_2 = arith.constant 0.000000e+00 : f32
    %10 = vector.broadcast %cst : f32 to vector<512x16xf32>
    %11 = vector.broadcast %cst_2 : f32 to vector<512x16xf32>
    %12 = arith.select %9, %10, %11 : vector<512x16xi1>, vector<512x16xf32>
    %cst_3 = arith.constant dense<0.000000e+00> : vector<2x16xf32>
    %13 = tpu.matmul %0, %12, %cst_3 {dimension_numbers = #tpu.dot_dimension_numbers<[1], [0], [0], [1], [0, 0, 1, 1], [], []>} : vector<2x512xf32>, vector<512x16xf32>, vector<2x16xf32> -> vector<2x16xf32>
    %cst_4 = arith.constant 3.125000e-02 : f32
    %14 = vector.broadcast %cst_4 : f32 to vector<2x16xf32>
    %15 = arith.mulf %13, %14 : vector<2x16xf32>
    %c0_5 = arith.constant 0 : index
    %c0_6 = arith.constant 0 : index
    %16 = vector.load %arg2[%c0_5, %c0_6] : memref<16x128xf32, #tpu.memory_space<vmem>>, vector<16x128xf32>
    %cst_7 = arith.constant dense<0.000000e+00> : vector<2x128xf32>
    %17 = tpu.matmul %15, %16, %cst_7 {dimension_numbers = #tpu.dot_dimension_numbers<[1], [0], [0], [1], [0, 0, 1, 1], [], []>} : vector<2x16xf32>, vector<16x128xf32>, vector<2x128xf32> -> vector<2x128xf32>
    %c0_8 = arith.constant 0 : index
    %c0_9 = arith.constant 0 : index
    %18 = vector.load %arg3[%c0_8, %c0_9] : memref<1x128xf32, #tpu.memory_space<vmem>>, vector<1x128xf32>
    %19 = vector.broadcast %18 : vector<1x128xf32> to vector<2x128xf32>
    %20 = arith.addf %17, %19 : vector<2x128xf32>
    %cst_10 = arith.constant 0.000000e+00 : f32
    %21 = vector.broadcast %cst_10 : f32 to vector<2x128xf32>
    %22 = arith.maximumf %20, %21 : vector<2x128xf32>
    %c0_11 = arith.constant 0 : index
    %c0_12 = arith.constant 0 : index
    %23 = vector.load %arg4[%c0_11, %c0_12] : memref<128x16xf32, #tpu.memory_space<vmem>>, vector<128x16xf32>
    %cst_13 = arith.constant dense<0.000000e+00> : vector<2x16xf32>
    %24 = tpu.matmul %22, %23, %cst_13 {dimension_numbers = #tpu.dot_dimension_numbers<[1], [0], [0], [1], [0, 0, 1, 1], [], []>} : vector<2x128xf32>, vector<128x16xf32>, vector<2x16xf32> -> vector<2x16xf32>
    %c0_14 = arith.constant 0 : index
    %c0_15 = arith.constant 0 : index
    %25 = vector.load %arg5[%c0_14, %c0_15] : memref<1x16xf32, #tpu.memory_space<vmem>>, vector<1x16xf32>
    %26 = vector.broadcast %25 : vector<1x16xf32> to vector<2x16xf32>
    %27 = arith.addf %24, %26 : vector<2x16xf32>
    %28 = arith.negf %27 : vector<2x16xf32>
    %29 = math.exp %28 : vector<2x16xf32>
    %cst_16 = arith.constant 1.000000e+00 : f32
    %30 = vector.broadcast %cst_16 : f32 to vector<2x16xf32>
    %31 = arith.addf %30, %29 : vector<2x16xf32>
    %32 = arith.divf %30, %31 : vector<2x16xf32>
    %33 = tpu.iota {dimensions = array<i32: 0>} : vector<16x512xi32>
    %c32_i32_17 = arith.constant 32 : i32
    %34 = vector.broadcast %c32_i32_17 : i32 to vector<16x512xi32>
    %35 = arith.muli %33, %34 : vector<16x512xi32>
    %36 = tpu.iota {dimensions = array<i32: 1>} : vector<16x512xi32>
    %37 = arith.cmpi sge, %36, %35 : vector<16x512xi32>
    %c32_i32_18 = arith.constant 32 : i32
    %38 = vector.broadcast %c32_i32_18 : i32 to vector<16x512xi32>
    %39 = arith.addi %35, %38 : vector<16x512xi32>
    %40 = arith.cmpi slt, %36, %39 : vector<16x512xi32>
    %41 = arith.andi %37, %40 : vector<16x512xi1>
    %cst_19 = arith.constant 1.000000e+00 : f32
    %cst_20 = arith.constant 0.000000e+00 : f32
    %42 = vector.broadcast %cst_19 : f32 to vector<16x512xf32>
    %43 = vector.broadcast %cst_20 : f32 to vector<16x512xf32>
    %44 = arith.select %41, %42, %43 : vector<16x512xi1>, vector<16x512xf32>
    %cst_21 = arith.constant dense<0.000000e+00> : vector<2x512xf32>
    %45 = tpu.matmul %32, %44, %cst_21 {dimension_numbers = #tpu.dot_dimension_numbers<[1], [0], [0], [1], [0, 0, 1, 1], [], []>} : vector<2x16xf32>, vector<16x512xf32>, vector<2x512xf32> -> vector<2x512xf32>
    %46 = arith.mulf %0, %45 : vector<2x512xf32>
    %c0_22 = arith.constant 0 : index
    %c0_23 = arith.constant 0 : index
    %47 = vector.load %arg6[%c0_22, %c0_23] : memref<2x512xf32, #tpu.memory_space<vmem>>, vector<2x512xf32>
    tpu.vector_store %arg6[%c0_22, %c0_23], %46 {strides = array<i32>} : memref<2x512xf32, #tpu.memory_space<vmem>>, vector<2x512xf32>,
    return
  }
  func.func @transform_0(%arg0: i32) -> (i32, i32) {
    %c0_i32 = arith.constant 0 : i32
    %c0_i32_0 = arith.constant 0 : i32
    return %arg0, %c0_i32 : i32, i32
  }
  func.func @transform_1(%arg0: i32) -> (i32, i32) {
    %c0_i32 = arith.constant 0 : i32
    %c0_i32_0 = arith.constant 0 : i32
    %c0_i32_1 = arith.constant 0 : i32
    return %c0_i32, %c0_i32_0 : i32, i32
  }
  func.func @transform_2(%arg0: i32) -> (i32, i32) {
    %c0_i32 = arith.constant 0 : i32
    %c0_i32_0 = arith.constant 0 : i32
    %c0_i32_1 = arith.constant 0 : i32
    return %c0_i32, %c0_i32_0 : i32, i32
  }
  func.func @transform_3(%arg0: i32) -> (i32, i32) {
    %c0_i32 = arith.constant 0 : i32
    %c0_i32_0 = arith.constant 0 : i32
    %c0_i32_1 = arith.constant 0 : i32
    return %c0_i32, %c0_i32_0 : i32, i32
  }
  func.func @transform_4(%arg0: i32) -> (i32, i32) {
    %c0_i32 = arith.constant 0 : i32
    %c0_i32_0 = arith.constant 0 : i32
    %c0_i32_1 = arith.constant 0 : i32
    return %c0_i32, %c0_i32_0 : i32, i32
  }
  func.func @transform_5(%arg0: i32) -> (i32, i32) {
    %c0_i32 = arith.constant 0 : i32
    %c0_i32_0 = arith.constant 0 : i32
    return %arg0, %c0_i32 : i32, i32
  }
}

</mosaic_0001>

<llo_original>
// kernel: se_module.1
$region0: #{se_module.1}
  #allocation0 [shape = 'u32[]', space=smem, size = 0x4, offset = 0x4, fixed_abs, tag = 'smem constant byte address 0x4 - core index']
  #allocation1 [shape = 'u32[72,128]{1,0:T(1,128)}', space=vmem, size = 0x9000, scoped, tag = 'internal scratch']
  %s0 = inlined_call_operand.vmem [shape: f32[2,512], index: 0, kind: input, shape index: {}]
  %s1 = inlined_call_operand.vmem [shape: f32[16,128], index: 1, kind: input, shape index: {}]
  %s2 = inlined_call_operand.vmem [shape: f32[1,128], index: 2, kind: input, shape index: {}]
  %s3 = inlined_call_operand.vmem [shape: f32[128,16], index: 3, kind: input, shape index: {}]
  %s4 = inlined_call_operand.vmem [shape: f32[1,16], index: 4, kind: input, shape index: {}]
  %s5 = inlined_call_operand.vmem [shape: f32[2,512], index: 5, kind: output, shape index: {}]
  %s6 = sld [smem:[#allocation0]]
  $region30: #{se_module.1} parent=0
    _
  %s8 = ssub.s32 1, %s6
  %s9 = scalar_select 0, %s8, %s6
  // Predicated region
  $region2: #{se_module.1} parent=0 // pred_check
    _
  $region3: #{se_module.1} parent=0 // pred_check_branch
    %11 = sbr.rel (0) target = $region5
  $region4: #{se_module.1} parent=0 // pred_region
    _
  $region5: #{se_module.1} parent=0 // pred_fallthru
    _
  // Predicated region
  $region6: #{se_module.1} parent=0 // pred_check
    _
  $region7: #{se_module.1} parent=0 // pred_check_branch
    %13 = sbr.rel (0) target = $region9
  $region8: #{se_module.1} parent=0 // pred_region
    _
  $region9: #{se_module.1} parent=0 // pred_fallthru
    _
  // Predicated region
  $region10: #{se_module.1} parent=0 // pred_check
    _
  $region11: #{se_module.1} parent=0 // pred_check_branch
    %15 = sbr.rel (0) target = $region13
  $region12: #{se_module.1} parent=0 // pred_region
    _
  $region13: #{se_module.1} parent=0 // pred_fallthru
    _
  // Predicated region
  $region14: #{se_module.1} parent=0 // pred_check
    _
  $region15: #{se_module.1} parent=0 // pred_check_branch
    %17 = sbr.rel (0) target = $region17
  $region16: #{se_module.1} parent=0 // pred_region
    _
  $region17: #{se_module.1} parent=0 // pred_fallthru
    _
  // Predicated region
  $region18: #{se_module.1} parent=0 // pred_check
    _
  $region19: #{se_module.1} parent=0 // pred_check_branch
    %19 = sbr.rel (0) target = $region21
  $region20: #{se_module.1} parent=0 // pred_region
    _
  $region21: #{se_module.1} parent=0 // pred_fallthru
    _
  %v20 = vld [vmem:[%s0] sm:$0xff]
  %v21 = vlaneseq
  %v22 = vshrl.u32 %v21, 7
  %v23 = vadd.s32 %v22, 8
  %v24 = vadd.s32 %v22, 16
  %v25 = vadd.s32 %v22, 24
  %v26 = vadd.s32 %v22, 32
  %v27 = vadd.s32 %v22, 40
  %v28 = vadd.s32 %v22, 48
  %v29 = vadd.s32 %v22, 56
  %v30 = vadd.s32 %v22, 64
  %v31 = vadd.s32 %v22, 72
  %v32 = vadd.s32 %v22, 80
  %v33 = vadd.s32 %v22, 88
  %v34 = vadd.s32 %v22, 96
  %v35 = vadd.s32 %v22, 104
  %v36 = vadd.s32 %v22, 112
  %v37 = vadd.s32 %v22, 120
  %v38 = vadd.s32 %v22, 128
  %v39 = vadd.s32 %v22, 136
  %v40 = vadd.s32 %v22, 144
  %v41 = vadd.s32 %v22, 152
  %v42 = vadd.s32 %v22, 160
  %v43 = vadd.s32 %v22, 168
  %v44 = vadd.s32 %v22, 176
  %v45 = vadd.s32 %v22, 184
  %v46 = vadd.s32 %v22, 192
  %v47 = vadd.s32 %v22, 200
  %v48 = vadd.s32 %v22, 208
  %v49 = vadd.s32 %v22, 216
  %v50 = vadd.s32 %v22, 224
  %v51 = vadd.s32 %v22, 232
  %v52 = vadd.s32 %v22, 240
  %v53 = vadd.s32 %v22, 248
  %v54 = vadd.s32 %v22, 256
  %v55 = vadd.s32 %v22, 264
  %v56 = vadd.s32 %v22, 272
  %v57 = vadd.s32 %v22, 280
  %v58 = vadd.s32 %v22, 288
  %v59 = vadd.s32 %v22, 296
  %v60 = vadd.s32 %v22, 304
  %v61 = vadd.s32 %v22, 312
  %v62 = vadd.s32 %v22, 320
  %v63 = vadd.s32 %v22, 328
  %v64 = vadd.s32 %v22, 336
  %v65 = vadd.s32 %v22, 344
  %v66 = vadd.s32 %v22, 352
  %v67 = vadd.s32 %v22, 360
  %v68 = vadd.s32 %v22, 368
  %v69 = vadd.s32 %v22, 376
  %v70 = vadd.s32 %v22, 384
  %v71 = vadd.s32 %v22, 392
  %v72 = vadd.s32 %v22, 400
  %v73 = vadd.s32 %v22, 408
  %v74 = vadd.s32 %v22, 416
  %v75 = vadd.s32 %v22, 424
  %v76 = vadd.s32 %v22, 432
  %v77 = vadd.s32 %v22, 440
  %v78 = vadd.s32 %v22, 448
  %v79 = vadd.s32 %v22, 456
  %v80 = vadd.s32 %v22, 464
  %v81 = vadd.s32 %v22, 472
  %v82 = vadd.s32 %v22, 480
  %v83 = vadd.s32 %v22, 488
  %v84 = vadd.s32 %v22, 496
  %v85 = vadd.s32 %v22, 504
  %v86 = vlaneseq
  %v87 = vand.u32 %v86, 127
  %v88 = vmul.u32 %v87, 32
  %vm89 = vcmp.ge.s32.totalorder %v22, %v88
  %vm90 = vcmp.ge.s32.totalorder %v23, %v88
  %vm91 = vcmp.ge.s32.totalorder %v24, %v88
  %vm92 = vcmp.ge.s32.totalorder %v25, %v88
  %vm93 = vcmp.ge.s32.totalorder %v26, %v88
  %vm94 = vcmp.ge.s32.totalorder %v27, %v88
  %vm95 = vcmp.ge.s32.totalorder %v28, %v88
  %vm96 = vcmp.ge.s32.totalorder %v29, %v88
  %vm97 = vcmp.ge.s32.totalorder %v30, %v88
  %vm98 = vcmp.ge.s32.totalorder %v31, %v88
  %vm99 = vcmp.ge.s32.totalorder %v32, %v88
  %vm100 = vcmp.ge.s32.totalorder %v33, %v88
  %vm101 = vcmp.ge.s32.totalorder %v34, %v88
  %vm102 = vcmp.ge.s32.totalorder %v35, %v88
  %vm103 = vcmp.ge.s32.totalorder %v36, %v88
  %vm104 = vcmp.ge.s32.totalorder %v37, %v88
  %vm105 = vcmp.ge.s32.totalorder %v38, %v88
  %vm106 = vcmp.ge.s32.totalorder %v39, %v88
  %vm107 = vcmp.ge.s32.totalorder %v40, %v88
  %vm108 = vcmp.ge.s32.totalorder %v41, %v88
  %vm109 = vcmp.ge.s32.totalorder %v42, %v88
  %vm110 = vcmp.ge.s32.totalorder %v43, %v88
  %vm111 = vcmp.ge.s32.totalorder %v44, %v88
  %vm112 = vcmp.ge.s32.totalorder %v45, %v88
  %vm113 = vcmp.ge.s32.totalorder %v46, %v88
  %vm114 = vcmp.ge.s32.totalorder %v47, %v88
  %vm115 = vcmp.ge.s32.totalorder %v48, %v88
  %vm116 = vcmp.ge.s32.totalorder %v49, %v88
  %vm117 = vcmp.ge.s32.totalorder %v50, %v88
  %vm118 = vcmp.ge.s32.totalorder %v51, %v88
  %vm119 = vcmp.ge.s32.totalorder %v52, %v88
  %vm120 = vcmp.ge.s32.totalorder %v53, %v88
  %vm121 = vcmp.ge.s32.totalorder %v54, %v88
  %vm122 = vcmp.ge.s32.totalorder %v55, %v88
  %vm123 = vcmp.ge.s32.totalorder %v56, %v88
  %vm124 = vcmp.ge.s32.totalorder %v57, %v88
  %vm125 = vcmp.ge.s32.totalorder %v58, %v88
  %vm126 = vcmp.ge.s32.totalorder %v59, %v88
  %vm127 = vcmp.ge.s32.totalorder %v60, %v88
  %vm128 = vcmp.ge.s32.totalorder %v61, %v88
  %vm129 = vcmp.ge.s32.totalorder %v62, %v88
  %vm130 = vcmp.ge.s32.totalorder %v63, %v88
  %vm131 = vcmp.ge.s32.totalorder %v64, %v88
  %vm132 = vcmp.ge.s32.totalorder %v65, %v88
  %vm133 = vcmp.ge.s32.totalorder %v66, %v88
  %vm134 = vcmp.ge.s32.totalorder %v67, %v88
  %vm135 = vcmp.ge.s32.totalorder %v68, %v88
  %vm136 = vcmp.ge.s32.totalorder %v69, %v88
  %vm137 = vcmp.ge.s32.totalorder %v70, %v88
  %vm138 = vcmp.ge.s32.totalorder %v71, %v88
  %vm139 = vcmp.ge.s32.totalorder %v72, %v88
  %vm140 = vcmp.ge.s32.totalorder %v73, %v88
  %vm141 = vcmp.ge.s32.totalorder %v74, %v88
  %vm142 = vcmp.ge.s32.totalorder %v75, %v88
  %vm143 = vcmp.ge.s32.totalorder %v76, %v88
  %vm144 = vcmp.ge.s32.totalorder %v77, %v88
  %vm145 = vcmp.ge.s32.totalorder %v78, %v88
  %vm146 = vcmp.ge.s32.totalorder %v79, %v88
  %vm147 = vcmp.ge.s32.totalorder %v80, %v88
  %vm148 = vcmp.ge.s32.totalorder %v81, %v88
  %vm149 = vcmp.ge.s32.totalorder %v82, %v88
  %vm150 = vcmp.ge.s32.totalorder %v83, %v88
  %vm151 = vcmp.ge.s32.totalorder %v84, %v88
  %vm152 = vcmp.ge.s32.totalorder %v85, %v88
  %v153 = vadd.s32 %v88, 32
  %vm154 = vcmp.lt.s32.totalorder %v22, %v153
  %vm155 = vcmp.lt.s32.totalorder %v23, %v153
  %vm156 = vcmp.lt.s32.totalorder %v24, %v153
  %vm157 = vcmp.lt.s32.totalorder %v25, %v153
  %vm158 = vcmp.lt.s32.totalorder %v26, %v153
  %vm159 = vcmp.lt.s32.totalorder %v27, %v153
  %vm160 = vcmp.lt.s32.totalorder %v28, %v153
  %vm161 = vcmp.lt.s32.totalorder %v29, %v153
  %vm162 = vcmp.lt.s32.totalorder %v30, %v153
  %vm163 = vcmp.lt.s32.totalorder %v31, %v153
  %vm164 = vcmp.lt.s32.totalorder %v32, %v153
  %vm165 = vcmp.lt.s32.totalorder %v33, %v153
  %vm166 = vcmp.lt.s32.totalorder %v34, %v153
  %vm167 = vcmp.lt.s32.totalorder %v35, %v153
  %vm168 = vcmp.lt.s32.totalorder %v36, %v153
  %vm169 = vcmp.lt.s32.totalorder %v37, %v153
  %vm170 = vcmp.lt.s32.totalorder %v38, %v153
  %vm171 = vcmp.lt.s32.totalorder %v39, %v153
  %vm172 = vcmp.lt.s32.totalorder %v40, %v153
  %vm173 = vcmp.lt.s32.totalorder %v41, %v153
  %vm174 = vcmp.lt.s32.totalorder %v42, %v153
  %vm175 = vcmp.lt.s32.totalorder %v43, %v153
  %vm176 = vcmp.lt.s32.totalorder %v44, %v153
  %vm177 = vcmp.lt.s32.totalorder %v45, %v153
  %vm178 = vcmp.lt.s32.totalorder %v46, %v153
  %vm179 = vcmp.lt.s32.totalorder %v47, %v153
  %vm180 = vcmp.lt.s32.totalorder %v48, %v153
  %vm181 = vcmp.lt.s32.totalorder %v49, %v153
  %vm182 = vcmp.lt.s32.totalorder %v50, %v153
  %vm183 = vcmp.lt.s32.totalorder %v51, %v153
  %vm184 = vcmp.lt.s32.totalorder %v52, %v153
  %vm185 = vcmp.lt.s32.totalorder %v53, %v153
  %vm186 = vcmp.lt.s32.totalorder %v54, %v153
  %vm187 = vcmp.lt.s32.totalorder %v55, %v153
  %vm188 = vcmp.lt.s32.totalorder %v56, %v153
  %vm189 = vcmp.lt.s32.totalorder %v57, %v153
  %vm190 = vcmp.lt.s32.totalorder %v58, %v153
  %vm191 = vcmp.lt.s32.totalorder %v59, %v153
  %vm192 = vcmp.lt.s32.totalorder %v60, %v153
  %vm193 = vcmp.lt.s32.totalorder %v61, %v153
  %vm194 = vcmp.lt.s32.totalorder %v62, %v153
  %vm195 = vcmp.lt.s32.totalorder %v63, %v153
  %vm196 = vcmp.lt.s32.totalorder %v64, %v153
  %vm197 = vcmp.lt.s32.totalorder %v65, %v153
  %vm198 = vcmp.lt.s32.totalorder %v66, %v153
  %vm199 = vcmp.lt.s32.totalorder %v67, %v153
  %vm200 = vcmp.lt.s32.totalorder %v68, %v153
  %vm201 = vcmp.lt.s32.totalorder %v69, %v153
  %vm202 = vcmp.lt.s32.totalorder %v70, %v153
  %vm203 = vcmp.lt.s32.totalorder %v71, %v153
  %vm204 = vcmp.lt.s32.totalorder %v72, %v153
  %vm205 = vcmp.lt.s32.totalorder %v73, %v153
  %vm206 = vcmp.lt.s32.totalorder %v74, %v153
  %vm207 = vcmp.lt.s32.totalorder %v75, %v153
  %vm208 = vcmp.lt.s32.totalorder %v76, %v153
  %vm209 = vcmp.lt.s32.totalorder %v77, %v153
  %vm210 = vcmp.lt.s32.totalorder %v78, %v153
  %vm211 = vcmp.lt.s32.totalorder %v79, %v153
  %vm212 = vcmp.lt.s32.totalorder %v80, %v153
  %vm213 = vcmp.lt.s32.totalorder %v81, %v153
  %vm214 = vcmp.lt.s32.totalorder %v82, %v153
  %vm215 = vcmp.lt.s32.totalorder %v83, %v153
  %vm216 = vcmp.lt.s32.totalorder %v84, %v153
  %vm217 = vcmp.lt.s32.totalorder %v85, %v153
  %vm218 = vmand %vm89, %vm154
  %vm219 = vmand %vm90, %vm155
  %vm220 = vmand %vm91, %vm156
  %vm221 = vmand %vm92, %vm157
  %vm222 = vmand %vm93, %vm158
  %vm223 = vmand %vm94, %vm159
  %vm224 = vmand %vm95, %vm160
  %vm225 = vmand %vm96, %vm161
  %vm226 = vmand %vm97, %vm162
  %vm227 = vmand %vm98, %vm163
  %vm228 = vmand %vm99, %vm164
  %vm229 = vmand %vm100, %vm165
  %vm230 = vmand %vm101, %vm166
  %vm231 = vmand %vm102, %vm167
  %vm232 = vmand %vm103, %vm168
  %vm233 = vmand %vm104, %vm169
  %vm234 = vmand %vm105, %vm170
  %vm235 = vmand %vm106, %vm171
  %vm236 = vmand %vm107, %vm172
  %vm237 = vmand %vm108, %vm173
  %vm238 = vmand %vm109, %vm174
  %vm239 = vmand %vm110, %vm175
  %vm240 = vmand %vm111, %vm176
  %vm241 = vmand %vm112, %vm177
  %vm242 = vmand %vm113, %vm178
  %vm243 = vmand %vm114, %vm179
  %vm244 = vmand %vm115, %vm180
  %vm245 = vmand %vm116, %vm181
  %vm246 = vmand %vm117, %vm182
  %vm247 = vmand %vm118, %vm183
  %vm248 = vmand %vm119, %vm184
  %vm249 = vmand %vm120, %vm185
  %vm250 = vmand %vm121, %vm186
  %vm251 = vmand %vm122, %vm187
  %vm252 = vmand %vm123, %vm188
  %vm253 = vmand %vm124, %vm189
  %vm254 = vmand %vm125, %vm190
  %vm255 = vmand %vm126, %vm191
  %vm256 = vmand %vm127, %vm192
  %vm257 = vmand %vm128, %vm193
  %vm258 = vmand %vm129, %vm194
  %vm259 = vmand %vm130, %vm195
  %vm260 = vmand %vm131, %vm196
  %vm261 = vmand %vm132, %vm197
  %vm262 = vmand %vm133, %vm198
  %vm263 = vmand %vm134, %vm199
  %vm264 = vmand %vm135, %vm200
  %vm265 = vmand %vm136, %vm201
  %vm266 = vmand %vm137, %vm202
  %vm267 = vmand %vm138, %vm203
  %vm268 = vmand %vm139, %vm204
  %vm269 = vmand %vm140, %vm205
  %vm270 = vmand %vm141, %vm206
  %vm271 = vmand %vm142, %vm207
  %vm272 = vmand %vm143, %vm208
  %vm273 = vmand %vm144, %vm209
  %vm274 = vmand %vm145, %vm210
  %vm275 = vmand %vm146, %vm211
  %vm276 = vmand %vm147, %vm212
  %vm277 = vmand %vm148, %vm213
  %vm278 = vmand %vm149, %vm214
  %vm279 = vmand %vm150, %vm215
  %vm280 = vmand %vm151, %vm216
  %vm281 = vmand %vm152, %vm217
  %v282 = vsel %vm218, 1.0, 0.0
  %v283 = vsel %vm219, 1.0, 0.0
  %v284 = vsel %vm220, 1.0, 0.0
  %v285 = vsel %vm221, 1.0, 0.0
  %v286 = vsel %vm222, 1.0, 0.0
  %v287 = vsel %vm223, 1.0, 0.0
  %v288 = vsel %vm224, 1.0, 0.0
  %v289 = vsel %vm225, 1.0, 0.0
  %v290 = vsel %vm226, 1.0, 0.0
  %v291 = vsel %vm227, 1.0, 0.0
  %v292 = vsel %vm228, 1.0, 0.0
  %v293 = vsel %vm229, 1.0, 0.0
  %v294 = vsel %vm230, 1.0, 0.0
  %v295 = vsel %vm231, 1.0, 0.0
  %v296 = vsel %vm232, 1.0, 0.0
  %v297 = vsel %vm233, 1.0, 0.0
  %v298 = vsel %vm234, 1.0, 0.0
  %v299 = vsel %vm235, 1.0, 0.0
  %v300 = vsel %vm236, 1.0, 0.0
  %v301 = vsel %vm237, 1.0, 0.0
  %v302 = vsel %vm238, 1.0, 0.0
  %v303 = vsel %vm239, 1.0, 0.0
  %v304 = vsel %vm240, 1.0, 0.0
  %v305 = vsel %vm241, 1.0, 0.0
  %v306 = vsel %vm242, 1.0, 0.0
  %v307 = vsel %vm243, 1.0, 0.0
  %v308 = vsel %vm244, 1.0, 0.0
  %v309 = vsel %vm245, 1.0, 0.0
  %v310 = vsel %vm246, 1.0, 0.0
  %v311 = vsel %vm247, 1.0, 0.0
  %v312 = vsel %vm248, 1.0, 0.0
  %v313 = vsel %vm249, 1.0, 0.0
  %v314 = vsel %vm250, 1.0, 0.0
  %v315 = vsel %vm251, 1.0, 0.0
  %v316 = vsel %vm252, 1.0, 0.0
  %v317 = vsel %vm253, 1.0, 0.0
  %v318 = vsel %vm254, 1.0, 0.0
  %v319 = vsel %vm255, 1.0, 0.0
  %v320 = vsel %vm256, 1.0, 0.0
  %v321 = vsel %vm257, 1.0, 0.0
  %v322 = vsel %vm258, 1.0, 0.0
  %v323 = vsel %vm259, 1.0, 0.0
  %v324 = vsel %vm260, 1.0, 0.0
  %v325 = vsel %vm261, 1.0, 0.0
  %v326 = vsel %vm262, 1.0, 0.0
  %v327 = vsel %vm263, 1.0, 0.0
  %v328 = vsel %vm264, 1.0, 0.0
  %v329 = vsel %vm265, 1.0, 0.0
  %v330 = vsel %vm266, 1.0, 0.0
  %v331 = vsel %vm267, 1.0, 0.0
  %v332 = vsel %vm268, 1.0, 0.0
  %v333 = vsel %vm269, 1.0, 0.0
  %v334 = vsel %vm270, 1.0, 0.0
  %v335 = vsel %vm271, 1.0, 0.0
  %v336 = vsel %vm272, 1.0, 0.0
  %v337 = vsel %vm273, 1.0, 0.0
  %v338 = vsel %vm274, 1.0, 0.0
  %v339 = vsel %vm275, 1.0, 0.0
  %v340 = vsel %vm276, 1.0, 0.0
  %v341 = vsel %vm277, 1.0, 0.0
  %v342 = vsel %vm278, 1.0, 0.0
  %v343 = vsel %vm279, 1.0, 0.0
  %v344 = vsel %vm280, 1.0, 0.0
  %v345 = vsel %vm281, 1.0, 0.0
  %347 = vst [vmem:[#allocation1] ss:$4 sm:$0xff] %v20
  %v348 = vld.sshfl [vmem:[#allocation1] sm:$0xff pattern:$0x73625140]
  %v349 = vld.sshfl [vmem:[#allocation1 + $0x8] sm:$0xff pattern:$0x73625140]
  %v350 = vld.sshfl [vmem:[#allocation1 + $0x10] sm:$0xff pattern:$0x73625140]
  %v351 = vld.sshfl [vmem:[#allocation1 + $0x18] sm:$0xff pattern:$0x73625140]
  %356 = vmatpush.msra.mxu0 %v297
  %357 = vmatpush.msra.mxu0 %v296
  %358 = vmatpush.msra.mxu0 %v295
  %359 = vmatpush.msra.mxu0 %v294
  %360 = vmatpush.msra.mxu0 %v293
  %361 = vmatpush.msra.mxu0 %v292
  %362 = vmatpush.msra.mxu0 %v291
  %363 = vmatpush.msra.mxu0 %v290
  %364 = vmatpush.msra.mxu0 %v289
  %365 = vmatpush.msra.mxu0 %v288
  %366 = vmatpush.msra.mxu0 %v287
  %367 = vmatpush.msra.mxu0 %v286
  %368 = vmatpush.msra.mxu0 %v285
  %369 = vmatpush.msra.mxu0 %v284
  %370 = vmatpush.msra.mxu0 %v283
  %371 = vmatpush.msra.mxu0 %v282
  %372 = vmatmul.f32.gmra.mxu0 %v348
  %v373 = vpop.f32.mrf.mxu0
  %v374 = vadd.f32 0.0, %v373
  %375 = vdwg.mxu0
  %376 = vmatpush.msra.mxu0 %v313
  %377 = vmatpush.msra.mxu0 %v312
  %378 = vmatpush.msra.mxu0 %v311
  %379 = vmatpush.msra.mxu0 %v310
  %380 = vmatpush.msra.mxu0 %v309
  %381 = vmatpush.msra.mxu0 %v308
  %382 = vmatpush.msra.mxu0 %v307
  %383 = vmatpush.msra.mxu0 %v306
  %384 = vmatpush.msra.mxu0 %v305
  %385 = vmatpush.msra.mxu0 %v304
  %386 = vmatpush.msra.mxu0 %v303
  %387 = vmatpush.msra.mxu0 %v302
  %388 = vmatpush.msra.mxu0 %v301
  %389 = vmatpush.msra.mxu0 %v300
  %390 = vmatpush.msra.mxu0 %v299
  %391 = vmatpush.msra.mxu0 %v298
  %392 = vmatmul.f32.gmra.mxu0 %v349
  %v393 = vpop.f32.mrf.mxu0
  %v394 = vadd.f32 %v374, %v393
  %395 = vdwg.mxu0
  %396 = vmatpush.msra.mxu0 %v329
  %397 = vmatpush.msra.mxu0 %v328
  %398 = vmatpush.msra.mxu0 %v327
  %399 = vmatpush.msra.mxu0 %v326
  %400 = vmatpush.msra.mxu0 %v325
  %401 = vmatpush.msra.mxu0 %v324
  %402 = vmatpush.msra.mxu0 %v323
  %403 = vmatpush.msra.mxu0 %v322
  %404 = vmatpush.msra.mxu0 %v321
  %405 = vmatpush.msra.mxu0 %v320
  %406 = vmatpush.msra.mxu0 %v319
  %407 = vmatpush.msra.mxu0 %v318
  %408 = vmatpush.msra.mxu0 %v317
  %409 = vmatpush.msra.mxu0 %v316
  %410 = vmatpush.msra.mxu0 %v315
  %411 = vmatpush.msra.mxu0 %v314
  %412 = vmatmul.f32.gmra.mxu0 %v350
  %v413 = vpop.f32.mrf.mxu0
  %v414 = vadd.f32 %v394, %v413
  %415 = vdwg.mxu0
  %416 = vmatpush.msra.mxu0 %v345
  %417 = vmatpush.msra.mxu0 %v344
  %418 = vmatpush.msra.mxu0 %v343
  %419 = vmatpush.msra.mxu0 %v342
  %420 = vmatpush.msra.mxu0 %v341
  %421 = vmatpush.msra.mxu0 %v340
  %422 = vmatpush.msra.mxu0 %v339
  %423 = vmatpush.msra.mxu0 %v338
  %424 = vmatpush.msra.mxu0 %v337
  %425 = vmatpush.msra.mxu0 %v336
  %426 = vmatpush.msra.mxu0 %v335
  %427 = vmatpush.msra.mxu0 %v334
  %428 = vmatpush.msra.mxu0 %v333
  %429 = vmatpush.msra.mxu0 %v332
  %430 = vmatpush.msra.mxu0 %v331
  %431 = vmatpush.msra.mxu0 %v330
  %432 = vmatmul.f32.gmra.mxu0 %v351
  %v433 = vpop.f32.mrf.mxu0
  %v434 = vadd.f32 %v414, %v433
  %435 = vdwg.mxu0
  %v436 = vmul.f32 %v434, 0.03125
  %v437 = vld [vmem:[%s1] sm:$0xff]
  %v438 = vld [vmem:[%s1 + $0x8] sm:$0xff]
  %v439 = vld [vmem:[%s2] sm:$0x1]
  %v441 = vperm.slane %v439, 0
  %vm443 = vcmask 130048
  %v445 = vsel %vm443, %v436, 0
  %447 = vmatpush.msra.mxu0 0.0
  %448 = vmatpush.msra.mxu0 0.0
  %449 = vmatpush.msra.mxu0 0.0
  %450 = vmatpush.msra.mxu0 0.0
  %451 = vmatpush.msra.mxu0 0.0
  %452 = vmatpush.msra.mxu0 0.0
  %453 = vmatpush.msra.mxu0 0.0
  %454 = vmatpush.msra.mxu0 0.0
  %455 = vmatpush.msra.mxu0 0.0
  %456 = vmatpush.msra.mxu0 0.0
  %457 = vmatpush.msra.mxu0 0.0
  %458 = vmatpush.msra.mxu0 0.0
  %459 = vmatpush.msra.mxu0 0.0
  %460 = vmatpush.msra.mxu0 0.0
  %461 = vmatpush.msra.mxu0 %v438
  %462 = vmatpush.msra.mxu0 %v437
  %463 = vmatmul.f32.gmra.mxu0 %v445
  %v464 = vpop.f32.mrf.mxu0
  %v465 = vadd.f32 %v441, %v464
  %466 = vdwg.mxu0
  %v467 = vmax.f32 %v465, 0.0
  %v468 = vld [vmem:[%s3] sm:$0xff]
  %v469 = vld [vmem:[%s3 + $0x8] sm:$0xff]
  %v470 = vld [vmem:[%s3 + $0x10] sm:$0xff]
  %v471 = vld [vmem:[%s3 + $0x18] sm:$0xff]
  %v472 = vld [vmem:[%s3 + $0x20] sm:$0xff]
  %v473 = vld [vmem:[%s3 + $0x28] sm:$0xff]
  %v474 = vld [vmem:[%s3 + $0x30] sm:$0xff]
  %v475 = vld [vmem:[%s3 + $0x38] sm:$0xff]
  %v476 = vld [vmem:[%s3 + $0x40] sm:$0xff]
  %v477 = vld [vmem:[%s3 + $0x48] sm:$0xff]
  %v478 = vld [vmem:[%s3 + $0x50] sm:$0xff]
  %v479 = vld [vmem:[%s3 + $0x58] sm:$0xff]
  %v480 = vld [vmem:[%s3 + $0x60] sm:$0xff]
  %v481 = vld [vmem:[%s3 + $0x68] sm:$0xff]
  %v482 = vld [vmem:[%s3 + $0x70] sm:$0xff]
  %v483 = vld [vmem:[%s3 + $0x78] sm:$0xff]
  %v484 = vld [vmem:[%s4] sm:$0x1]
  %v486 = vperm.slane %v484, 0
  %488 = vmatpush.msra.mxu0 %v483
  %489 = vmatpush.msra.mxu0 %v482
  %490 = vmatpush.msra.mxu0 %v481
  %491 = vmatpush.msra.mxu0 %v480
  %492 = vmatpush.msra.mxu0 %v479
  %493 = vmatpush.msra.mxu0 %v478
  %494 = vmatpush.msra.mxu0 %v477
  %495 = vmatpush.msra.mxu0 %v476
  %496 = vmatpush.msra.mxu0 %v475
  %497 = vmatpush.msra.mxu0 %v474
  %498 = vmatpush.msra.mxu0 %v473
  %499 = vmatpush.msra.mxu0 %v472
  %500 = vmatpush.msra.mxu0 %v471
  %501 = vmatpush.msra.mxu0 %v470
  %502 = vmatpush.msra.mxu0 %v469
  %503 = vmatpush.msra.mxu0 %v468
  %504 = vmatmul.f32.gmra.mxu0 %v467
  %v505 = vpop.f32.mrf.mxu0
  %v506 = vadd.f32 %v486, %v505
  %507 = vdwg.mxu0
  %v508 = vxor.u32 %v506, 2147483648
  %v509 = vmul.f32 %v508, 1.442695
  %v510 = vpow.pop %v509
  %v511 = vadd.f32 %v510, 1.0
  %v512 = vrcp.pop %v511
  %v513 = vmul.f32 %v511, %v512
  %v514 = vsub.f32 1.0, %v513
  %v515 = vmul.f32 %v512, %v514
  %v516 = vadd.f32 %v512, %v515
  %vm517 = vweird.f32 %v511
  %vm518 = vweird.f32 %v512
  %vm519 = vmor %vm517, %vm518
  %v520 = vsel %vm519, %v512, %v516
  %v521 = vand.u32 2147483647, %v511
  %vm522 = vcmp.eq.f32.partialorder %v521, 8.507059e+37
  %v523 = vand.u32 %v511, 2147483648
  %v524 = vor.u32 1.1754944e-38, %v523
  %v525 = vsel %vm522, %v524, %v520
  %v526 = vmul.f32 1.0, %v525
  %v527 = vmul.u32 %v22, 32
  %v528 = vmul.u32 %v23, 32
  %v529 = vadd.s32 %v87, 128
  %v530 = vadd.s32 %v87, 256
  %v531 = vadd.s32 %v87, 384
  %vm532 = vcmp.ge.s32.totalorder %v87, %v527
  %vm533 = vcmp.ge.s32.totalorder %v529, %v527
  %vm534 = vcmp.ge.s32.totalorder %v530, %v527
  %vm535 = vcmp.ge.s32.totalorder %v531, %v527
  %vm536 = vcmp.ge.s32.totalorder %v87, %v528
  %vm537 = vcmp.ge.s32.totalorder %v529, %v528
  %vm538 = vcmp.ge.s32.totalorder %v530, %v528
  %vm539 = vcmp.ge.s32.totalorder %v531, %v528
  %v540 = vadd.s32 %v527, 32
  %v541 = vadd.s32 %v528, 32
  %vm542 = vcmp.lt.s32.totalorder %v87, %v540
  %vm543 = vcmp.lt.s32.totalorder %v529, %v540
  %vm544 = vcmp.lt.s32.totalorder %v530, %v540
  %vm545 = vcmp.lt.s32.totalorder %v531, %v540
  %vm546 = vcmp.lt.s32.totalorder %v87, %v541
  %vm547 = vcmp.lt.s32.totalorder %v529, %v541
  %vm548 = vcmp.lt.s32.totalorder %v530, %v541
  %vm549 = vcmp.lt.s32.totalorder %v531, %v541
  %vm550 = vmand %vm532, %vm542
  %vm551 = vmand %vm533, %vm543
  %vm552 = vmand %vm534, %vm544
  %vm553 = vmand %vm535, %vm545
  %vm554 = vmand %vm536, %vm546
  %vm555 = vmand %vm537, %vm547
  %vm556 = vmand %vm538, %vm548
  %vm557 = vmand %vm539, %vm549
  %v558 = vsel %vm550, 1.0, 0.0
  %v559 = vsel %vm551, 1.0, 0.0
  %v560 = vsel %vm552, 1.0, 0.0
  %v561 = vsel %vm553, 1.0, 0.0
  %v562 = vsel %vm554, 1.0, 0.0
  %v563 = vsel %vm555, 1.0, 0.0
  %v564 = vsel %vm556, 1.0, 0.0
  %v565 = vsel %vm557, 1.0, 0.0
  %v567 = vsel %vm443, %v526, 0
  %569 = vmatpush.msra.mxu0 0.0
  %570 = vmatpush.msra.mxu0 0.0
  %571 = vmatpush.msra.mxu0 0.0
  %572 = vmatpush.msra.mxu0 0.0
  %573 = vmatpush.msra.mxu0 0.0
  %574 = vmatpush.msra.mxu0 0.0
  %575 = vmatpush.msra.mxu0 0.0
  %576 = vmatpush.msra.mxu0 0.0
  %577 = vmatpush.msra.mxu0 0.0
  %578 = vmatpush.msra.mxu0 0.0
  %579 = vmatpush.msra.mxu0 0.0
  %580 = vmatpush.msra.mxu0 0.0
  %581 = vmatpush.msra.mxu0 0.0
  %582 = vmatpush.msra.mxu0 0.0
  %583 = vmatpush.msra.mxu0 %v562
  %584 = vmatpush.msra.mxu0 %v558
  %585 = vmatmul.f32.gmra.mxu0 %v567
  %v586 = vpop.f32.mrf.mxu0
  %v587 = vadd.f32 0.0, %v586
  %588 = vdwg.mxu0
  %589 = vmatpush.msra.mxu0 0.0
  %590 = vmatpush.msra.mxu0 0.0
  %591 = vmatpush.msra.mxu0 0.0
  %592 = vmatpush.msra.mxu0 0.0
  %593 = vmatpush.msra.mxu0 0.0
  %594 = vmatpush.msra.mxu0 0.0
  %595 = vmatpush.msra.mxu0 0.0
  %596 = vmatpush.msra.mxu0 0.0
  %597 = vmatpush.msra.mxu0 0.0
  %598 = vmatpush.msra.mxu0 0.0
  %599 = vmatpush.msra.mxu0 0.0
  %600 = vmatpush.msra.mxu0 0.0
  %601 = vmatpush.msra.mxu0 0.0
  %602 = vmatpush.msra.mxu0 0.0
  %603 = vmatpush.msra.mxu0 %v563
  %604 = vmatpush.msra.mxu0 %v559
  %605 = vmatmul.f32.gmra.mxu0 %v567
  %v606 = vpop.f32.mrf.mxu0
  %v607 = vadd.f32 0.0, %v606
  %608 = vdwg.mxu0
  %609 = vmatpush.msra.mxu0 0.0
  %610 = vmatpush.msra.mxu0 0.0
  %611 = vmatpush.msra.mxu0 0.0
  %612 = vmatpush.msra.mxu0 0.0
  %613 = vmatpush.msra.mxu0 0.0
  %614 = vmatpush.msra.mxu0 0.0
  %615 = vmatpush.msra.mxu0 0.0
  %616 = vmatpush.msra.mxu0 0.0
  %617 = vmatpush.msra.mxu0 0.0
  %618 = vmatpush.msra.mxu0 0.0
  %619 = vmatpush.msra.mxu0 0.0
  %620 = vmatpush.msra.mxu0 0.0
  %621 = vmatpush.msra.mxu0 0.0
  %622 = vmatpush.msra.mxu0 0.0
  %623 = vmatpush.msra.mxu0 %v564
  %624 = vmatpush.msra.mxu0 %v560
  %625 = vmatmul.f32.gmra.mxu0 %v567
  %v626 = vpop.f32.mrf.mxu0
  %v627 = vadd.f32 0.0, %v626
  %628 = vdwg.mxu0
  %629 = vmatpush.msra.mxu0 0.0
  %630 = vmatpush.msra.mxu0 0.0
  %631 = vmatpush.msra.mxu0 0.0
  %632 = vmatpush.msra.mxu0 0.0
  %633 = vmatpush.msra.mxu0 0.0
  %634 = vmatpush.msra.mxu0 0.0
  %635 = vmatpush.msra.mxu0 0.0
  %636 = vmatpush.msra.mxu0 0.0
  %637 = vmatpush.msra.mxu0 0.0
  %638 = vmatpush.msra.mxu0 0.0
  %639 = vmatpush.msra.mxu0 0.0
  %640 = vmatpush.msra.mxu0 0.0
  %641 = vmatpush.msra.mxu0 0.0
  %642 = vmatpush.msra.mxu0 0.0
  %643 = vmatpush.msra.mxu0 %v565
  %644 = vmatpush.msra.mxu0 %v561
  %645 = vmatmul.f32.gmra.mxu0 %v567
  %v646 = vpop.f32.mrf.mxu0
  %v647 = vadd.f32 0.0, %v646
  %648 = vdwg.mxu0
  %v653 = vrot.slane %v607, 6
  %v654 = vrot.slane %v627, 4
  %v655 = vrot.slane %v647, 2
  %vm656 = vcmask 1041408
  %v657 = vsel %vm656, %v587, %v653
  %vm658 = vcmask 1045508
  %v659 = vsel %vm658, %v654, %v655
  %vm660 = vcmask 1043456
  %v661 = vsel %vm660, %v657, %v659
  %v663 = vmul.f32 %v20, %v661
  %664 = vst [vmem:[%s5] sm:$0xff] %v663
  // Predicated region
  $region22: #{se_module.1} parent=0 // pred_check
    _
  $region23: #{se_module.1} parent=0 // pred_check_branch
    %666 = sbr.rel (0) target = $region25
  $region24: #{se_module.1} parent=0 // pred_region
    _
  $region25: #{se_module.1} parent=0 // pred_fallthru
    _
  // Predicated region
  $region26: #{se_module.1} parent=0 // pred_check
    _
  $region27: #{se_module.1} parent=0 // pred_check_branch
    %668 = sbr.rel (0) target = $region29
  $region28: #{se_module.1} parent=0 // pred_region
    _
  $region29: #{se_module.1} parent=0 // pred_fallthru
    _

</llo_original>
